<compile_context>
chip_gen: v6e
topology: v6e:2x2x1
jax: 0.10.0
libtpu: 0.0.40
codegen_flags: <defaults>
</compile_context>

<pallas_src>
import functools
import math

import jax
import jax.numpy as jnp
from jax.experimental import pallas as pl
from jax.experimental.pallas import tpu as pltpu


def _round_up(x: int, m: int) -> int:
    return (x + m - 1) // m * m


def _pad2d(a, rows: int, cols: int):
    r, c = a.shape
    if r == rows and c == cols:
        return a
    return jnp.pad(a, ((0, rows - r), (0, cols - c)))


def _fused_kernel(x_ref, enc_w_ref, enc_b_ref, head_wt_ref, head_b_ref,
                  logits_ref, acc_ref, *, normalize: bool, emit_feats: bool):
    """Fused encoder projection + (optional) L2-normalize + linear head.

    x_ref:       [bm, tk]  bf16  flattened image tile
    enc_w_ref:   [tk, Dp]  bf16  encoder stand-in weight tile
    enc_b_ref:   [1,  Dp]  f32
    head_wt_ref: [Dp, Cp]  bf16  classification head weight, pre-transposed
    head_b_ref:  [1,  Cp]  f32
    logits_ref:  [bm, Cp]  f32   output
    acc_ref:     [bm, Dp]  f32   K-axis accumulator: the resident features
                                 *output* block when emit_feats, else a VMEM
                                 scratch (logits-only variant).
    """
    k = pl.program_id(1)

    partial = jnp.dot(x_ref[...], enc_w_ref[...],
                      preferred_element_type=jnp.float32)

    @pl.when(k == 0)
    def _first():
        acc_ref[...] = partial          # first partial product: no zero-fill

    @pl.when(k > 0)
    def _accum():
        acc_ref[...] += partial

    @pl.when(k == pl.num_programs(1) - 1)
    def _finalize():
        f = acc_ref[...] + enc_b_ref[...]
        if normalize:
            # Matches torch `features / features.norm(dim=-1, keepdim=True)`
            # (an all-zero row yields non-finite values in both).
            f = f * jax.lax.rsqrt(jnp.sum(f * f, axis=-1, keepdims=True))
        if emit_feats:
            acc_ref[...] = f            # acc_ref IS the features output block
        logits = jnp.dot(f.astype(jnp.bfloat16), head_wt_ref[...],
                         preferred_element_type=jnp.float32)
        logits_ref[...] = logits + head_b_ref[...]


def prepare_params(enc_w, enc_b, head_w, head_b, *, tk: int = 1024):
    """One-time padding / bf16 cast / head transpose (hoisted out of forward).

    enc_w: [K, D]  stand-in encoder projection
    enc_b: [D]
    head_w: [C, D] classification_head.weight (PyTorch layout)
    head_b: [C]
    """
    K, D = enc_w.shape
    C = head_w.shape[0]
    Dp = _round_up(D, 128)
    Cp = _round_up(C, 128)
    tk_eff = min(tk, _round_up(K, 128))
    Kp = _round_up(K, tk_eff)
    return {
        "enc_w": _pad2d(enc_w.astype(jnp.bfloat16), Kp, Dp),
        "enc_b": _pad2d(enc_b.astype(jnp.float32).reshape(1, D), 1, Dp),
        # Pre-transposed to [D, C]: MXU-native [K, N] layout (no in-kernel
        # relayout), padded with zeros (mathematically inert).
        "head_wt": _pad2d(head_w.astype(jnp.bfloat16).T, Dp, Cp),
        "head_b": _pad2d(head_b.astype(jnp.float32).reshape(1, C), 1, Cp),
        "dims": (K, D, C, Kp, Dp, Cp, tk_eff),
    }


def model_wrapper_forward(images, params, *, normalize: bool,
                          return_features: bool = False, bm: int = 256):
    """JAX/Pallas equivalent of ModelWrapper.forward."""
    K, D, C, Kp, Dp, Cp, tk_eff = params["dims"]
    B = images.shape[0]
    x = images.reshape(B, -1).astype(jnp.bfloat16)   # cast BEFORE padding
    assert x.shape[1] == K, "flattened image size does not match encoder K"

    # Batch tiling: cap at `bm` (<=256 default, v7x VMEM-safe), tiles are
    # multiples of 16 rows (bf16 sublane packing); mid-sized batches split
    # into >=2 tiles so both v7x TensorCores get work on the parallel axis.
    bm_eff = min(bm, _round_up(B, 16))
    if B >= 32:
        bm_eff = min(bm_eff, _round_up(-(-B // 2), 16))
    Bp = _round_up(B, bm_eff)

    x_p = _pad2d(x, Bp, Kp)

    grid = (Bp // bm_eff, Kp // tk_eff)
    kernel = functools.partial(_fused_kernel, normalize=normalize,
                               emit_feats=return_features)

    if return_features:
        # Features output doubles as the resident K-axis accumulator.
        out_shape = (jax.ShapeDtypeStruct((Bp, Cp), jnp.float32),
                     jax.ShapeDtypeStruct((Bp, Dp), jnp.float32))
        out_specs = (pl.BlockSpec((bm_eff, Cp), lambda i, k: (i, 0)),
                     pl.BlockSpec((bm_eff, Dp), lambda i, k: (i, 0)))
        scratch_shapes = ()
    else:
        # Logits-only variant: no feature HBM writeback, scratch accumulator.
        out_shape = jax.ShapeDtypeStruct((Bp, Cp), jnp.float32)
        out_specs = pl.BlockSpec((bm_eff, Cp), lambda i, k: (i, 0))
        scratch_shapes = (pltpu.VMEM((bm_eff, Dp), jnp.float32),)

    vmem_limit = (64 if bm_eff > 256 else 32) * 1024 * 1024

    result = pl.pallas_call(
        kernel,
        out_shape=out_shape,
        grid_spec=pltpu.PrefetchScalarGridSpec(
            num_scalar_prefetch=0,
            grid=grid,
            in_specs=[
                pl.BlockSpec((bm_eff, tk_eff), lambda i, k: (i, k)),   # x
                pl.BlockSpec((tk_eff, Dp), lambda i, k: (k, 0)),       # enc_w
                pl.BlockSpec((1, Dp), lambda i, k: (0, 0)),            # enc_b
                pl.BlockSpec((Dp, Cp), lambda i, k: (0, 0)),           # head_w.T
                pl.BlockSpec((1, Cp), lambda i, k: (0, 0)),            # head_b
            ],
            out_specs=out_specs,
            scratch_shapes=scratch_shapes,
        ),
        compiler_params=pltpu.CompilerParams(
            dimension_semantics=("parallel", "arbitrary"),
            vmem_limit_bytes=vmem_limit,
        ),
    )(x_p, params["enc_w"], params["enc_b"], params["head_wt"], params["head_b"])

    if return_features:
        logits_p, feats_p = result
        return logits_p[:B, :C], feats_p[:B, :D]
    return result[:B, :C]


if __name__ == "__main__":
    key = jax.random.PRNGKey(0)
    k_img, k_enc, k_head = jax.random.split(key, 3)

    # Small shapes consistent with the module.
    B, C_in, H, W = 2, 4, 16, 16
    feature_dim, num_classes = 32, 8
    in_flat = C_in * H * W

    images = jax.random.normal(k_img, (B, C_in, H, W), dtype=jnp.float32)

    # Stand-in encoder params (deterministic).
    enc_w = 0.02 * jax.random.normal(k_enc, (in_flat, feature_dim), dtype=jnp.float32)
    enc_b = jnp.zeros((feature_dim,), dtype=jnp.float32)

    # Classification head: kaiming_uniform_(a=sqrt(5)) => bound = 1/sqrt(fan_in);
    # bias zero-initialized (as in ModelWrapper.__init__).
    bound = 1.0 / math.sqrt(feature_dim)
    head_w = jax.random.uniform(k_head, (num_classes, feature_dim),
                                minval=-bound, maxval=bound, dtype=jnp.float32)
    head_b = jnp.zeros((num_classes,), dtype=jnp.float32)

    # One-time parameter preparation (pad / cast / transpose), hoisted out of
    # the per-call forward.
    params = prepare_params(enc_w, enc_b, head_w, head_b)

    logits, feats = model_wrapper_forward(images, params, normalize=True,
                                          return_features=True)
    logits_only = model_wrapper_forward(images, params, normalize=True,
                                        return_features=False)
    jax.block_until_ready((logits, feats, logits_only))

    # Reference check in plain JAX (f32); kernel uses bf16 MXU operands with
    # f32 accumulation, so tolerance is relaxed accordingly.
    feats_ref = images.reshape(B, -1) @ enc_w + enc_b
    feats_ref = feats_ref / jnp.linalg.norm(feats_ref, axis=-1, keepdims=True)
    logits_ref = feats_ref @ head_w.T + head_b

    assert logits.shape == (B, num_classes)
    assert feats.shape == (B, feature_dim)
    assert logits_only.shape == (B, num_classes)
    assert jnp.allclose(logits, logits_ref, atol=2e-2, rtol=2e-2)
    assert jnp.allclose(feats, feats_ref, atol=2e-2, rtol=2e-2)
    assert jnp.allclose(logits_only, logits, atol=1e-5, rtol=1e-5)

    print("KERNEL_OK")
</pallas_src>

<mosaic_0001>
module attributes {stable_mosaic.version = 11 : i64} {
  func.func @_fused_kernel(%arg0: i32, %arg1: i32, %arg2: memref<16x1024xbf16, #tpu.memory_space<vmem>>, %arg3: memref<1024x128xbf16, #tpu.memory_space<vmem>>, %arg4: memref<1x128xf32, #tpu.memory_space<vmem>>, %arg5: memref<128x128xbf16, #tpu.memory_space<vmem>>, %arg6: memref<1x128xf32, #tpu.memory_space<vmem>>, %arg7: memref<16x128xf32, #tpu.memory_space<vmem>>, %arg8: memref<16x128xf32, #tpu.memory_space<vmem>>) attributes {dimension_semantics = [#tpu.dimension_semantics<parallel>, #tpu.dimension_semantics<arbitrary>], iteration_bounds = array<i64: 1, 1>, scalar_prefetch = 0 : i64, scratch_operands = 0 : i64, tpu.core_type = #tpu.core_type<tc>, window_params = [{transform_indices = @transform_0, window_bounds = array<i64: 16, 1024>}, {transform_indices = @transform_1, window_bounds = array<i64: 1024, 128>}, {pipeline_mode = #tpu.pipeline_mode<synchronous>, transform_indices = @transform_2, window_bounds = array<i64: 1, 128>}, {pipeline_mode = #tpu.pipeline_mode<synchronous>, transform_indices = @transform_3, window_bounds = array<i64: 128, 128>}, {pipeline_mode = #tpu.pipeline_mode<synchronous>, transform_indices = @transform_4, window_bounds = array<i64: 1, 128>}, {transform_indices = @transform_5, window_bounds = array<i64: 16, 128>}, {transform_indices = @transform_6, window_bounds = array<i64: 16, 128>}]} {
    %c0 = arith.constant 0 : index
    %c0_0 = arith.constant 0 : index
    %0 = vector.load %arg2[%c0, %c0_0] : memref<16x1024xbf16, #tpu.memory_space<vmem>>, vector<16x1024xbf16>
    %c0_1 = arith.constant 0 : index
    %c0_2 = arith.constant 0 : index
    %1 = vector.load %arg3[%c0_1, %c0_2] : memref<1024x128xbf16, #tpu.memory_space<vmem>>, vector<1024x128xbf16>
    %cst = arith.constant dense<0.000000e+00> : vector<16x128xf32>
    %2 = tpu.matmul %0, %1, %cst {dimension_numbers = #tpu.dot_dimension_numbers<[1], [0], [0], [1], [0, 0, 1, 1], [], []>} : vector<16x1024xbf16>, vector<1024x128xbf16>, vector<16x128xf32> -> vector<16x128xf32>
    %c0_i32 = arith.constant 0 : i32
    %3 = arith.cmpi eq, %arg1, %c0_i32 : i32
    %4 = arith.extui %3 : i1 to i32
    %c0_i32_3 = arith.constant 0 : i32
    %5 = arith.cmpi ne, %4, %c0_i32_3 : i32
    scf.if %5 {
      %c0_8 = arith.constant 0 : index
      %c0_9 = arith.constant 0 : index
      %12 = vector.load %arg8[%c0_8, %c0_9] : memref<16x128xf32, #tpu.memory_space<vmem>>, vector<16x128xf32>
      tpu.vector_store %arg8[%c0_8, %c0_9], %2 {strides = array<i32>} : memref<16x128xf32, #tpu.memory_space<vmem>>, vector<16x128xf32>,
    } else {
    }
    %c0_i32_4 = arith.constant 0 : i32
    %6 = arith.cmpi sgt, %arg1, %c0_i32_4 : i32
    %7 = arith.extui %6 : i1 to i32
    %c0_i32_5 = arith.constant 0 : i32
    %8 = arith.cmpi ne, %7, %c0_i32_5 : i32
    scf.if %8 {
      %c0_8 = arith.constant 0 : index
      %c0_9 = arith.constant 0 : index
      %12 = vector.load %arg8[%c0_8, %c0_9] : memref<16x128xf32, #tpu.memory_space<vmem>>, vector<16x128xf32>
      %13 = arith.addf %12, %2 : vector<16x128xf32>
      %c0_10 = arith.constant 0 : index
      %c0_11 = arith.constant 0 : index
      %14 = vector.load %arg8[%c0_10, %c0_11] : memref<16x128xf32, #tpu.memory_space<vmem>>, vector<16x128xf32>
      tpu.vector_store %arg8[%c0_10, %c0_11], %13 {strides = array<i32>} : memref<16x128xf32, #tpu.memory_space<vmem>>, vector<16x128xf32>,
    } else {
    }
    %c0_i32_6 = arith.constant 0 : i32
    %9 = arith.cmpi eq, %arg1, %c0_i32_6 : i32
    %10 = arith.extui %9 : i1 to i32
    %c0_i32_7 = arith.constant 0 : i32
    %11 = arith.cmpi ne, %10, %c0_i32_7 : i32
    scf.if %11 {
      %c0_8 = arith.constant 0 : index
      %c0_9 = arith.constant 0 : index
      %12 = vector.load %arg8[%c0_8, %c0_9] : memref<16x128xf32, #tpu.memory_space<vmem>>, vector<16x128xf32>
      %c0_10 = arith.constant 0 : index
      %c0_11 = arith.constant 0 : index
      %13 = vector.load %arg4[%c0_10, %c0_11] : memref<1x128xf32, #tpu.memory_space<vmem>>, vector<1x128xf32>
      %14 = vector.broadcast %13 : vector<1x128xf32> to vector<16x128xf32>
      %15 = arith.addf %12, %14 : vector<16x128xf32>
      %16 = arith.mulf %15, %15 : vector<16x128xf32>
      %cst_12 = arith.constant dense<0.000000e+00> : vector<16xf32>
      %17 = vector.multi_reduction <add>, %16, %cst_12 [1] : vector<16x128xf32> to vector<16xf32>
      %18 = vector.shape_cast %17 : vector<16xf32> to vector<16x1xf32>
      %19 = math.rsqrt %18 : vector<16x1xf32>
      %20 = vector.broadcast %19 : vector<16x1xf32> to vector<16x128xf32>
      %21 = arith.mulf %15, %20 : vector<16x128xf32>
      %c0_13 = arith.constant 0 : index
      %c0_14 = arith.constant 0 : index
      %22 = vector.load %arg8[%c0_13, %c0_14] : memref<16x128xf32, #tpu.memory_space<vmem>>, vector<16x128xf32>
      tpu.vector_store %arg8[%c0_13, %c0_14], %21 {strides = array<i32>} : memref<16x128xf32, #tpu.memory_space<vmem>>, vector<16x128xf32>,
      %23 = arith.truncf %21 : vector<16x128xf32> to vector<16x128xbf16>
      %c0_15 = arith.constant 0 : index
      %c0_16 = arith.constant 0 : index
      %24 = vector.load %arg5[%c0_15, %c0_16] : memref<128x128xbf16, #tpu.memory_space<vmem>>, vector<128x128xbf16>
      %cst_17 = arith.constant dense<0.000000e+00> : vector<16x128xf32>
      %25 = tpu.matmul %23, %24, %cst_17 {dimension_numbers = #tpu.dot_dimension_numbers<[1], [0], [0], [1], [0, 0, 1, 1], [], []>} : vector<16x128xbf16>, vector<128x128xbf16>, vector<16x128xf32> -> vector<16x128xf32>
      %c0_18 = arith.constant 0 : index
      %c0_19 = arith.constant 0 : index
      %26 = vector.load %arg6[%c0_18, %c0_19] : memref<1x128xf32, #tpu.memory_space<vmem>>, vector<1x128xf32>
      %27 = vector.broadcast %26 : vector<1x128xf32> to vector<16x128xf32>
      %28 = arith.addf %25, %27 : vector<16x128xf32>
      %c0_20 = arith.constant 0 : index
      %c0_21 = arith.constant 0 : index
      %29 = vector.load %arg7[%c0_20, %c0_21] : memref<16x128xf32, #tpu.memory_space<vmem>>, vector<16x128xf32>
      tpu.vector_store %arg7[%c0_20, %c0_21], %28 {strides = array<i32>} : memref<16x128xf32, #tpu.memory_space<vmem>>, vector<16x128xf32>,
    } else {
    }
    return
  }
  func.func @transform_0(%arg0: i32, %arg1: i32) -> (i32, i32) {
    %c0_i32 = arith.constant 0 : i32
    return %arg0, %arg1 : i32, i32
  }
  func.func @transform_1(%arg0: i32, %arg1: i32) -> (i32, i32) {
    %c0_i32 = arith.constant 0 : i32
    %c0_i32_0 = arith.constant 0 : i32
    return %arg1, %c0_i32 : i32, i32
  }
  func.func @transform_2(%arg0: i32, %arg1: i32) -> (i32, i32) {
    %c0_i32 = arith.constant 0 : i32
    %c0_i32_0 = arith.constant 0 : i32
    %c0_i32_1 = arith.constant 0 : i32
    return %c0_i32, %c0_i32_0 : i32, i32
  }
  func.func @transform_3(%arg0: i32, %arg1: i32) -> (i32, i32) {
    %c0_i32 = arith.constant 0 : i32
    %c0_i32_0 = arith.constant 0 : i32
    %c0_i32_1 = arith.constant 0 : i32
    return %c0_i32, %c0_i32_0 : i32, i32
  }
  func.func @transform_4(%arg0: i32, %arg1: i32) -> (i32, i32) {
    %c0_i32 = arith.constant 0 : i32
    %c0_i32_0 = arith.constant 0 : i32
    %c0_i32_1 = arith.constant 0 : i32
    return %c0_i32, %c0_i32_0 : i32, i32
  }
  func.func @transform_5(%arg0: i32, %arg1: i32) -> (i32, i32) {
    %c0_i32 = arith.constant 0 : i32
    %c0_i32_0 = arith.constant 0 : i32
    return %arg0, %c0_i32 : i32, i32
  }
  func.func @transform_6(%arg0: i32, %arg1: i32) -> (i32, i32) {
    %c0_i32 = arith.constant 0 : i32
    %c0_i32_0 = arith.constant 0 : i32
    return %arg0, %c0_i32 : i32, i32
  }
}

</mosaic_0001>

<llo_original>
// kernel: tpu_custom_call.1
$region0: #{tpu_custom_call.1}
  #allocation0 [shape = 'u32[]', space=smem, size = 0x4, offset = 0x4, fixed_abs, tag = 'smem constant byte address 0x4 - core index']
  #allocation1 [shape = 'u32[144,128]{1,0:T(1,128)}', space=vmem, size = 0x12000, scoped, tag = 'internal scratch']
  %s0 = inlined_call_operand.hbm [shape: bf16[16,1024], index: 0, kind: input, shape index: {}]
  %s1 = inlined_call_operand.hbm [shape: bf16[1024,128], index: 1, kind: input, shape index: {}]
  %s2 = inlined_call_operand.vmem [shape: f32[1,128], index: 2, kind: input, shape index: {}]
  %s3 = inlined_call_operand.hbm [shape: bf16[128,128], index: 3, kind: input, shape index: {}]
  %s4 = inlined_call_operand.vmem [shape: f32[1,128], index: 4, kind: input, shape index: {}]
  %s5 = inlined_call_operand.hbm [shape: f32[16,128], index: 5, kind: output, shape index: {0}]
  %s6 = inlined_call_operand.hbm [shape: f32[16,128], index: 6, kind: output, shape index: {1}]
  %7 = xla_tuple %s5, %s6
  %s8 = sld [smem:[#allocation0]]
  $region62: #{tpu_custom_call.1} parent=0
    _
  %s10 = ssub.s32 1, %s8
  %s11 = scalar_select 0, %s10, %s8
  $region1: #{tpu_custom_call.1} parent=0
    #allocation2 [shape = 'u8[32768]{0}', space=vmem, size = 0x8000, scoped, tag = 'input window, operand 0, single buffered']
    #allocation3 [shape = 's32[1]{0}', space=sflag, size = 0x4, scoped, tag = 'scoped memory for tpu_custom_call.1']
    #allocation4 [shape = 's32[1]{0}', space=sflag, size = 0x4, scoped, tag = 'scoped memory for tpu_custom_call.1']
    #allocation5 [shape = 'u8[262144]{0}', space=vmem, size = 0x40000, scoped, tag = 'input window, operand 1, single buffered']
    #allocation6 [shape = 's32[1]{0}', space=sflag, size = 0x4, scoped, tag = 'scoped memory for tpu_custom_call.1']
    #allocation7 [shape = 'u8[32768]{0}', space=vmem, size = 0x8000, scoped, tag = 'input window, operand 3, single buffered']
    #allocation8 [shape = 'u8[8192]{0}', space=vmem, size = 0x2000, scoped, tag = 'output window, operand 0, single buffered']
    #allocation9 [shape = 'u8[8192]{0}', space=vmem, size = 0x2000, scoped, tag = 'output window, operand 1, single buffered']
    #allocation10 [shape = 's32[1]{0}', space=sflag, size = 0x4, scoped, tag = 'scoped memory for tpu_custom_call.1']
    %12 = vsyncpa [#allocation3], 0
    %13 = vsyncpa [#allocation6], 0
    %14 = vsyncpa [#allocation4], 0
    %15 = vsyncpa [#allocation10], 0
    // Predicated region
    $region2: #{tpu_custom_call.1} parent=1 // pred_check
      _
    $region3: #{tpu_custom_call.1} parent=1 // pred_check_branch
      %17 = sbr.rel (0) target = $region5
    $region4: #{tpu_custom_call.1} parent=1 // pred_region
      %s19 = ssub.s32 1024, 1024
      %20 = vsyncadd [#allocation3], %s19
      %s21 = sshll.u32 [#allocation2], 4
      %s22 = int_to_ptr.vmem [resolvable:$true] %s21
      %27 = dma.hbm_to_vmem [thread:$0]  %s0, 1024, %s22, [#allocation3], 512, 512, 32
    $region5: #{tpu_custom_call.1} parent=1 // pred_fallthru
      _
    // Predicated region
    $region6: #{tpu_custom_call.1} parent=1 // pred_check
      _
    $region7: #{tpu_custom_call.1} parent=1 // pred_check_branch
      %29 = sbr.rel (0) target = $region9
    $region8: #{tpu_custom_call.1} parent=1 // pred_region
      %s31 = ssub.s32 8192, 8192
      %32 = vsyncadd [#allocation6], %s31
      %s33 = sshll.u32 [#allocation5], 4
      %s34 = int_to_ptr.vmem [resolvable:$true] %s33
      %39 = dma.hbm_to_vmem [thread:$0]  %s1, 8192, %s34, [#allocation6], 64, 64, 4
    $region9: #{tpu_custom_call.1} parent=1 // pred_fallthru
      _
    // Predicated region
    $region10: #{tpu_custom_call.1} parent=1 // pred_check
      _
    $region11: #{tpu_custom_call.1} parent=1 // pred_check_branch
      %41 = sbr.rel (0) target = $region13
    $region12: #{tpu_custom_call.1} parent=1 // pred_region
      _
    $region13: #{tpu_custom_call.1} parent=1 // pred_fallthru
      _
    // Predicated region
    $region14: #{tpu_custom_call.1} parent=1 // pred_check
      _
    $region15: #{tpu_custom_call.1} parent=1 // pred_check_branch
      %43 = sbr.rel (0) target = $region17
    $region16: #{tpu_custom_call.1} parent=1 // pred_region
      %s45 = ssub.s32 1024, 1024
      %46 = vsyncadd [#allocation6], %s45
      %s47 = sshll.u32 [#allocation7], 4
      %s48 = int_to_ptr.vmem [resolvable:$true] %s47
      %53 = dma.hbm_to_vmem [thread:$0]  %s3, 1024, %s48, [#allocation6], 64, 64, 4
    $region17: #{tpu_custom_call.1} parent=1 // pred_fallthru
      _
    // Predicated region
    $region18: #{tpu_custom_call.1} parent=1 // pred_check
      _
    $region19: #{tpu_custom_call.1} parent=1 // pred_check_branch
      %55 = sbr.rel (0) target = $region21
    $region20: #{tpu_custom_call.1} parent=1 // pred_region
      _
    $region21: #{tpu_custom_call.1} parent=1 // pred_fallthru
      _
    // Predicated region
    $region22: #{tpu_custom_call.1} parent=1 // pred_check
      _
    $region23: #{tpu_custom_call.1} parent=1 // pred_check_branch
      %57 = sbr.rel (0) target = $region25
    $region24: #{tpu_custom_call.1} parent=1 // pred_region
      %58 = dma.done [#allocation3], 1024
    $region25: #{tpu_custom_call.1} parent=1 // pred_fallthru
      _
    // Predicated region
    $region26: #{tpu_custom_call.1} parent=1 // pred_check
      _
    $region27: #{tpu_custom_call.1} parent=1 // pred_check_branch
      %60 = sbr.rel (0) target = $region29
    $region28: #{tpu_custom_call.1} parent=1 // pred_region
      %61 = dma.done [#allocation6], 8192
    $region29: #{tpu_custom_call.1} parent=1 // pred_fallthru
      _
    // Predicated region
    $region30: #{tpu_custom_call.1} parent=1 // pred_check
      _
    $region31: #{tpu_custom_call.1} parent=1 // pred_check_branch
      %63 = sbr.rel (0) target = $region33
    $region32: #{tpu_custom_call.1} parent=1 // pred_region
      %64 = dma.done [#allocation6], 1024
    $region33: #{tpu_custom_call.1} parent=1 // pred_fallthru
      _
    %v66 = vld [vmem:[#allocation2] sm:$0xff]
    %v67 = vld [vmem:[#allocation2 + $0x8] sm:$0xff]
    %v68 = vld [vmem:[#allocation2 + $0x10] sm:$0xff]
    %v69 = vld [vmem:[#allocation2 + $0x18] sm:$0xff]
    %v70 = vld [vmem:[#allocation2 + $0x20] sm:$0xff]
    %v71 = vld [vmem:[#allocation2 + $0x28] sm:$0xff]
    %v72 = vld [vmem:[#allocation2 + $0x30] sm:$0xff]
    %v73 = vld [vmem:[#allocation2 + $0x38] sm:$0xff]
    %v74 = vld [vmem:[#allocation5] sm:$0xf]
    %v75 = vld [vmem:[#allocation5 + $0x4] sm:$0xf]
    %v76 = vld [vmem:[#allocation5 + $0x8] sm:$0xf]
    %v77 = vld [vmem:[#allocation5 + $0xc] sm:$0xf]
    %v78 = vld [vmem:[#allocation5 + $0x10] sm:$0xf]
    %v79 = vld [vmem:[#allocation5 + $0x14] sm:$0xf]
    %v80 = vld [vmem:[#allocation5 + $0x18] sm:$0xf]
    %v81 = vld [vmem:[#allocation5 + $0x1c] sm:$0xf]
    %v82 = vld [vmem:[#allocation5 + $0x20] sm:$0xf]
    %v83 = vld [vmem:[#allocation5 + $0x24] sm:$0xf]
    %v84 = vld [vmem:[#allocation5 + $0x28] sm:$0xf]
    %v85 = vld [vmem:[#allocation5 + $0x2c] sm:$0xf]
    %v86 = vld [vmem:[#allocation5 + $0x30] sm:$0xf]
    %v87 = vld [vmem:[#allocation5 + $0x34] sm:$0xf]
    %v88 = vld [vmem:[#allocation5 + $0x38] sm:$0xf]
    %v89 = vld [vmem:[#allocation5 + $0x3c] sm:$0xf]
    %v90 = vld [vmem:[#allocation5 + $0x40] sm:$0xf]
    %v91 = vld [vmem:[#allocation5 + $0x44] sm:$0xf]
    %v92 = vld [vmem:[#allocation5 + $0x48] sm:$0xf]
    %v93 = vld [vmem:[#allocation5 + $0x4c] sm:$0xf]
    %v94 = vld [vmem:[#allocation5 + $0x50] sm:$0xf]
    %v95 = vld [vmem:[#allocation5 + $0x54] sm:$0xf]
    %v96 = vld [vmem:[#allocation5 + $0x58] sm:$0xf]
    %v97 = vld [vmem:[#allocation5 + $0x5c] sm:$0xf]
    %v98 = vld [vmem:[#allocation5 + $0x60] sm:$0xf]
    %v99 = vld [vmem:[#allocation5 + $0x64] sm:$0xf]
    %v100 = vld [vmem:[#allocation5 + $0x68] sm:$0xf]
    %v101 = vld [vmem:[#allocation5 + $0x6c] sm:$0xf]
    %v102 = vld [vmem:[#allocation5 + $0x70] sm:$0xf]
    %v103 = vld [vmem:[#allocation5 + $0x74] sm:$0xf]
    %v104 = vld [vmem:[#allocation5 + $0x78] sm:$0xf]
    %v105 = vld [vmem:[#allocation5 + $0x7c] sm:$0xf]
    %v106 = vld [vmem:[#allocation5 + $0x80] sm:$0xf]
    %v107 = vld [vmem:[#allocation5 + $0x84] sm:$0xf]
    %v108 = vld [vmem:[#allocation5 + $0x88] sm:$0xf]
    %v109 = vld [vmem:[#allocation5 + $0x8c] sm:$0xf]
    %v110 = vld [vmem:[#allocation5 + $0x90] sm:$0xf]
    %v111 = vld [vmem:[#allocation5 + $0x94] sm:$0xf]
    %v112 = vld [vmem:[#allocation5 + $0x98] sm:$0xf]
    %v113 = vld [vmem:[#allocation5 + $0x9c] sm:$0xf]
    %v114 = vld [vmem:[#allocation5 + $0xa0] sm:$0xf]
    %v115 = vld [vmem:[#allocation5 + $0xa4] sm:$0xf]
    %v116 = vld [vmem:[#allocation5 + $0xa8] sm:$0xf]
    %v117 = vld [vmem:[#allocation5 + $0xac] sm:$0xf]
    %v118 = vld [vmem:[#allocation5 + $0xb0] sm:$0xf]
    %v119 = vld [vmem:[#allocation5 + $0xb4] sm:$0xf]
    %v120 = vld [vmem:[#allocation5 + $0xb8] sm:$0xf]
    %v121 = vld [vmem:[#allocation5 + $0xbc] sm:$0xf]
    %v122 = vld [vmem:[#allocation5 + $0xc0] sm:$0xf]
    %v123 = vld [vmem:[#allocation5 + $0xc4] sm:$0xf]
    %v124 = vld [vmem:[#allocation5 + $0xc8] sm:$0xf]
    %v125 = vld [vmem:[#allocation5 + $0xcc] sm:$0xf]
    %v126 = vld [vmem:[#allocation5 + $0xd0] sm:$0xf]
    %v127 = vld [vmem:[#allocation5 + $0xd4] sm:$0xf]
    %v128 = vld [vmem:[#allocation5 + $0xd8] sm:$0xf]
    %v129 = vld [vmem:[#allocation5 + $0xdc] sm:$0xf]
    %v130 = vld [vmem:[#allocation5 + $0xe0] sm:$0xf]
    %v131 = vld [vmem:[#allocation5 + $0xe4] sm:$0xf]
    %v132 = vld [vmem:[#allocation5 + $0xe8] sm:$0xf]
    %v133 = vld [vmem:[#allocation5 + $0xec] sm:$0xf]
    %v134 = vld [vmem:[#allocation5 + $0xf0] sm:$0xf]
    %v135 = vld [vmem:[#allocation5 + $0xf4] sm:$0xf]
    %v136 = vld [vmem:[#allocation5 + $0xf8] sm:$0xf]
    %v137 = vld [vmem:[#allocation5 + $0xfc] sm:$0xf]
    %v138 = vld [vmem:[#allocation5 + $0x100] sm:$0xf]
    %v139 = vld [vmem:[#allocation5 + $0x104] sm:$0xf]
    %v140 = vld [vmem:[#allocation5 + $0x108] sm:$0xf]
    %v141 = vld [vmem:[#allocation5 + $0x10c] sm:$0xf]
    %v142 = vld [vmem:[#allocation5 + $0x110] sm:$0xf]
    %v143 = vld [vmem:[#allocation5 + $0x114] sm:$0xf]
    %v144 = vld [vmem:[#allocation5 + $0x118] sm:$0xf]
    %v145 = vld [vmem:[#allocation5 + $0x11c] sm:$0xf]
    %v146 = vld [vmem:[#allocation5 + $0x120] sm:$0xf]
    %v147 = vld [vmem:[#allocation5 + $0x124] sm:$0xf]
    %v148 = vld [vmem:[#allocation5 + $0x128] sm:$0xf]
    %v149 = vld [vmem:[#allocation5 + $0x12c] sm:$0xf]
    %v150 = vld [vmem:[#allocation5 + $0x130] sm:$0xf]
    %v151 = vld [vmem:[#allocation5 + $0x134] sm:$0xf]
    %v152 = vld [vmem:[#allocation5 + $0x138] sm:$0xf]
    %v153 = vld [vmem:[#allocation5 + $0x13c] sm:$0xf]
    %v154 = vld [vmem:[#allocation5 + $0x140] sm:$0xf]
    %v155 = vld [vmem:[#allocation5 + $0x144] sm:$0xf]
    %v156 = vld [vmem:[#allocation5 + $0x148] sm:$0xf]
    %v157 = vld [vmem:[#allocation5 + $0x14c] sm:$0xf]
    %v158 = vld [vmem:[#allocation5 + $0x150] sm:$0xf]
    %v159 = vld [vmem:[#allocation5 + $0x154] sm:$0xf]
    %v160 = vld [vmem:[#allocation5 + $0x158] sm:$0xf]
    %v161 = vld [vmem:[#allocation5 + $0x15c] sm:$0xf]
    %v162 = vld [vmem:[#allocation5 + $0x160] sm:$0xf]
    %v163 = vld [vmem:[#allocation5 + $0x164] sm:$0xf]
    %v164 = vld [vmem:[#allocation5 + $0x168] sm:$0xf]
    %v165 = vld [vmem:[#allocation5 + $0x16c] sm:$0xf]
    %v166 = vld [vmem:[#allocation5 + $0x170] sm:$0xf]
    %v167 = vld [vmem:[#allocation5 + $0x174] sm:$0xf]
    %v168 = vld [vmem:[#allocation5 + $0x178] sm:$0xf]
    %v169 = vld [vmem:[#allocation5 + $0x17c] sm:$0xf]
    %v170 = vld [vmem:[#allocation5 + $0x180] sm:$0xf]
    %v171 = vld [vmem:[#allocation5 + $0x184] sm:$0xf]
    %v172 = vld [vmem:[#allocation5 + $0x188] sm:$0xf]
    %v173 = vld [vmem:[#allocation5 + $0x18c] sm:$0xf]
    %v174 = vld [vmem:[#allocation5 + $0x190] sm:$0xf]
    %v175 = vld [vmem:[#allocation5 + $0x194] sm:$0xf]
    %v176 = vld [vmem:[#allocation5 + $0x198] sm:$0xf]
    %v177 = vld [vmem:[#allocation5 + $0x19c] sm:$0xf]
    %v178 = vld [vmem:[#allocation5 + $0x1a0] sm:$0xf]
    %v179 = vld [vmem:[#allocation5 + $0x1a4] sm:$0xf]
    %v180 = vld [vmem:[#allocation5 + $0x1a8] sm:$0xf]
    %v181 = vld [vmem:[#allocation5 + $0x1ac] sm:$0xf]
    %v182 = vld [vmem:[#allocation5 + $0x1b0] sm:$0xf]
    %v183 = vld [vmem:[#allocation5 + $0x1b4] sm:$0xf]
    %v184 = vld [vmem:[#allocation5 + $0x1b8] sm:$0xf]
    %v185 = vld [vmem:[#allocation5 + $0x1bc] sm:$0xf]
    %v186 = vld [vmem:[#allocation5 + $0x1c0] sm:$0xf]
    %v187 = vld [vmem:[#allocation5 + $0x1c4] sm:$0xf]
    %v188 = vld [vmem:[#allocation5 + $0x1c8] sm:$0xf]
    %v189 = vld [vmem:[#allocation5 + $0x1cc] sm:$0xf]
    %v190 = vld [vmem:[#allocation5 + $0x1d0] sm:$0xf]
    %v191 = vld [vmem:[#allocation5 + $0x1d4] sm:$0xf]
    %v192 = vld [vmem:[#allocation5 + $0x1d8] sm:$0xf]
    %v193 = vld [vmem:[#allocation5 + $0x1dc] sm:$0xf]
    %v194 = vld [vmem:[#allocation5 + $0x1e0] sm:$0xf]
    %v195 = vld [vmem:[#allocation5 + $0x1e4] sm:$0xf]
    %v196 = vld [vmem:[#allocation5 + $0x1e8] sm:$0xf]
    %v197 = vld [vmem:[#allocation5 + $0x1ec] sm:$0xf]
    %v198 = vld [vmem:[#allocation5 + $0x1f0] sm:$0xf]
    %v199 = vld [vmem:[#allocation5 + $0x1f4] sm:$0xf]
    %v200 = vld [vmem:[#allocation5 + $0x1f8] sm:$0xf]
    %v201 = vld [vmem:[#allocation5 + $0x1fc] sm:$0xf]
    %v210 = vunpack.c.l.b16 %v66
    %v211 = vunpack.c.h.b16 %v66
    %v212 = vunpack.c.l.b16 %v67
    %v213 = vunpack.c.h.b16 %v67
    %v214 = vunpack.c.l.b16 %v68
    %v215 = vunpack.c.h.b16 %v68
    %v216 = vunpack.c.l.b16 %v69
    %v217 = vunpack.c.h.b16 %v69
    %v218 = vunpack.c.l.b16 %v70
    %v219 = vunpack.c.h.b16 %v70
    %v220 = vunpack.c.l.b16 %v71
    %v221 = vunpack.c.h.b16 %v71
    %v222 = vunpack.c.l.b16 %v72
    %v223 = vunpack.c.h.b16 %v72
    %v224 = vunpack.c.l.b16 %v73
    %v225 = vunpack.c.h.b16 %v73
    %v226 = vpack.c.b16 %v218, %v210
    %v227 = vpack.c.b16 %v219, %v211
    %v228 = vpack.c.b16 %v220, %v212
    %v229 = vpack.c.b16 %v221, %v213
    %v230 = vpack.c.b16 %v222, %v214
    %v231 = vpack.c.b16 %v223, %v215
    %v232 = vpack.c.b16 %v224, %v216
    %v233 = vpack.c.b16 %v225, %v217
    %v370 = vunpack.c.l.b16 %v74
    %v371 = vunpack.c.l.b16 %v75
    %v372 = vunpack.c.l.b16 %v76
    %v373 = vunpack.c.l.b16 %v77
    %v374 = vunpack.c.l.b16 %v78
    %v375 = vunpack.c.l.b16 %v79
    %v376 = vunpack.c.l.b16 %v80
    %v377 = vunpack.c.l.b16 %v81
    %v378 = vunpack.c.l.b16 %v82
    %v379 = vunpack.c.l.b16 %v83
    %v380 = vunpack.c.l.b16 %v84
    %v381 = vunpack.c.l.b16 %v85
    %v382 = vunpack.c.l.b16 %v86
    %v383 = vunpack.c.l.b16 %v87
    %v384 = vunpack.c.l.b16 %v88
    %v385 = vunpack.c.l.b16 %v89
    %v386 = vunpack.c.l.b16 %v90
    %v387 = vunpack.c.l.b16 %v91
    %v388 = vunpack.c.l.b16 %v92
    %v389 = vunpack.c.l.b16 %v93
    %v390 = vunpack.c.l.b16 %v94
    %v391 = vunpack.c.l.b16 %v95
    %v392 = vunpack.c.l.b16 %v96
    %v393 = vunpack.c.l.b16 %v97
    %v394 = vunpack.c.l.b16 %v98
    %v395 = vunpack.c.l.b16 %v99
    %v396 = vunpack.c.l.b16 %v100
    %v397 = vunpack.c.l.b16 %v101
    %v398 = vunpack.c.l.b16 %v102
    %v399 = vunpack.c.l.b16 %v103
    %v400 = vunpack.c.l.b16 %v104
    %v401 = vunpack.c.l.b16 %v105
    %v402 = vunpack.c.l.b16 %v106
    %v403 = vunpack.c.l.b16 %v107
    %v404 = vunpack.c.l.b16 %v108
    %v405 = vunpack.c.l.b16 %v109
    %v406 = vunpack.c.l.b16 %v110
    %v407 = vunpack.c.l.b16 %v111
    %v408 = vunpack.c.l.b16 %v112
    %v409 = vunpack.c.l.b16 %v113
    %v410 = vunpack.c.l.b16 %v114
    %v411 = vunpack.c.l.b16 %v115
    %v412 = vunpack.c.l.b16 %v116
    %v413 = vunpack.c.l.b16 %v117
    %v414 = vunpack.c.l.b16 %v118
    %v415 = vunpack.c.l.b16 %v119
    %v416 = vunpack.c.l.b16 %v120
    %v417 = vunpack.c.l.b16 %v121
    %v418 = vunpack.c.l.b16 %v122
    %v419 = vunpack.c.l.b16 %v123
    %v420 = vunpack.c.l.b16 %v124
    %v421 = vunpack.c.l.b16 %v125
    %v422 = vunpack.c.l.b16 %v126
    %v423 = vunpack.c.l.b16 %v127
    %v424 = vunpack.c.l.b16 %v128
    %v425 = vunpack.c.l.b16 %v129
    %v426 = vunpack.c.l.b16 %v130
    %v427 = vunpack.c.l.b16 %v131
    %v428 = vunpack.c.l.b16 %v132
    %v429 = vunpack.c.l.b16 %v133
    %v430 = vunpack.c.l.b16 %v134
    %v431 = vunpack.c.l.b16 %v135
    %v432 = vunpack.c.l.b16 %v136
    %v433 = vunpack.c.l.b16 %v137
    %v434 = vunpack.c.l.b16 %v138
    %v435 = vunpack.c.l.b16 %v139
    %v436 = vunpack.c.l.b16 %v140
    %v437 = vunpack.c.l.b16 %v141
    %v438 = vunpack.c.l.b16 %v142
    %v439 = vunpack.c.l.b16 %v143
    %v440 = vunpack.c.l.b16 %v144
    %v441 = vunpack.c.l.b16 %v145
    %v442 = vunpack.c.l.b16 %v146
    %v443 = vunpack.c.l.b16 %v147
    %v444 = vunpack.c.l.b16 %v148
    %v445 = vunpack.c.l.b16 %v149
    %v446 = vunpack.c.l.b16 %v150
    %v447 = vunpack.c.l.b16 %v151
    %v448 = vunpack.c.l.b16 %v152
    %v449 = vunpack.c.l.b16 %v153
    %v450 = vunpack.c.l.b16 %v154
    %v451 = vunpack.c.l.b16 %v155
    %v452 = vunpack.c.l.b16 %v156
    %v453 = vunpack.c.l.b16 %v157
    %v454 = vunpack.c.l.b16 %v158
    %v455 = vunpack.c.l.b16 %v159
    %v456 = vunpack.c.l.b16 %v160
    %v457 = vunpack.c.l.b16 %v161
    %v458 = vunpack.c.l.b16 %v162
    %v459 = vunpack.c.l.b16 %v163
    %v460 = vunpack.c.l.b16 %v164
    %v461 = vunpack.c.l.b16 %v165
    %v462 = vunpack.c.l.b16 %v166
    %v463 = vunpack.c.l.b16 %v167
    %v464 = vunpack.c.l.b16 %v168
    %v465 = vunpack.c.l.b16 %v169
    %v466 = vunpack.c.l.b16 %v170
    %v467 = vunpack.c.l.b16 %v171
    %v468 = vunpack.c.l.b16 %v172
    %v469 = vunpack.c.l.b16 %v173
    %v470 = vunpack.c.l.b16 %v174
    %v471 = vunpack.c.l.b16 %v175
    %v472 = vunpack.c.l.b16 %v176
    %v473 = vunpack.c.l.b16 %v177
    %v474 = vunpack.c.l.b16 %v178
    %v475 = vunpack.c.l.b16 %v179
    %v476 = vunpack.c.l.b16 %v180
    %v477 = vunpack.c.l.b16 %v181
    %v478 = vunpack.c.l.b16 %v182
    %v479 = vunpack.c.l.b16 %v183
    %v480 = vunpack.c.l.b16 %v184
    %v481 = vunpack.c.l.b16 %v185
    %v482 = vunpack.c.l.b16 %v186
    %v483 = vunpack.c.l.b16 %v187
    %v484 = vunpack.c.l.b16 %v188
    %v485 = vunpack.c.l.b16 %v189
    %v486 = vunpack.c.l.b16 %v190
    %v487 = vunpack.c.l.b16 %v191
    %v488 = vunpack.c.l.b16 %v192
    %v489 = vunpack.c.l.b16 %v193
    %v490 = vunpack.c.l.b16 %v194
    %v491 = vunpack.c.l.b16 %v195
    %v492 = vunpack.c.l.b16 %v196
    %v493 = vunpack.c.l.b16 %v197
    %v494 = vunpack.c.l.b16 %v198
    %v495 = vunpack.c.l.b16 %v199
    %v496 = vunpack.c.l.b16 %v200
    %v497 = vunpack.c.l.b16 %v201
    %v498 = vpack.c.b16 %v371, %v370
    %v499 = vpack.c.b16 %v373, %v372
    %v500 = vpack.c.b16 %v375, %v374
    %v501 = vpack.c.b16 %v377, %v376
    %v502 = vpack.c.b16 %v379, %v378
    %v503 = vpack.c.b16 %v381, %v380
    %v504 = vpack.c.b16 %v383, %v382
    %v505 = vpack.c.b16 %v385, %v384
    %v506 = vpack.c.b16 %v387, %v386
    %v507 = vpack.c.b16 %v389, %v388
    %v508 = vpack.c.b16 %v391, %v390
    %v509 = vpack.c.b16 %v393, %v392
    %v510 = vpack.c.b16 %v395, %v394
    %v511 = vpack.c.b16 %v397, %v396
    %v512 = vpack.c.b16 %v399, %v398
    %v513 = vpack.c.b16 %v401, %v400
    %v514 = vpack.c.b16 %v403, %v402
    %v515 = vpack.c.b16 %v405, %v404
    %v516 = vpack.c.b16 %v407, %v406
    %v517 = vpack.c.b16 %v409, %v408
    %v518 = vpack.c.b16 %v411, %v410
    %v519 = vpack.c.b16 %v413, %v412
    %v520 = vpack.c.b16 %v415, %v414
    %v521 = vpack.c.b16 %v417, %v416
    %v522 = vpack.c.b16 %v419, %v418
    %v523 = vpack.c.b16 %v421, %v420
    %v524 = vpack.c.b16 %v423, %v422
    %v525 = vpack.c.b16 %v425, %v424
    %v526 = vpack.c.b16 %v427, %v426
    %v527 = vpack.c.b16 %v429, %v428
    %v528 = vpack.c.b16 %v431, %v430
    %v529 = vpack.c.b16 %v433, %v432
    %v530 = vpack.c.b16 %v435, %v434
    %v531 = vpack.c.b16 %v437, %v436
    %v532 = vpack.c.b16 %v439, %v438
    %v533 = vpack.c.b16 %v441, %v440
    %v534 = vpack.c.b16 %v443, %v442
    %v535 = vpack.c.b16 %v445, %v444
    %v536 = vpack.c.b16 %v447, %v446
    %v537 = vpack.c.b16 %v449, %v448
    %v538 = vpack.c.b16 %v451, %v450
    %v539 = vpack.c.b16 %v453, %v452
    %v540 = vpack.c.b16 %v455, %v454
    %v541 = vpack.c.b16 %v457, %v456
    %v542 = vpack.c.b16 %v459, %v458
    %v543 = vpack.c.b16 %v461, %v460
    %v544 = vpack.c.b16 %v463, %v462
    %v545 = vpack.c.b16 %v465, %v464
    %v546 = vpack.c.b16 %v467, %v466
    %v547 = vpack.c.b16 %v469, %v468
    %v548 = vpack.c.b16 %v471, %v470
    %v549 = vpack.c.b16 %v473, %v472
    %v550 = vpack.c.b16 %v475, %v474
    %v551 = vpack.c.b16 %v477, %v476
    %v552 = vpack.c.b16 %v479, %v478
    %v553 = vpack.c.b16 %v481, %v480
    %v554 = vpack.c.b16 %v483, %v482
    %v555 = vpack.c.b16 %v485, %v484
    %v556 = vpack.c.b16 %v487, %v486
    %v557 = vpack.c.b16 %v489, %v488
    %v558 = vpack.c.b16 %v491, %v490
    %v559 = vpack.c.b16 %v493, %v492
    %v560 = vpack.c.b16 %v495, %v494
    %v561 = vpack.c.b16 %v497, %v496
    %626 = vmatprep.subr.bf16.mxu0 0
    %627 = vmatpush1.bf16.msra.mxu0 %v505
    %628 = vmatprep.subr.bf16.mxu0 0
    %629 = vmatpush1.bf16.msra.mxu0 %v504
    %630 = vmatprep.subr.bf16.mxu0 0
    %631 = vmatpush1.bf16.msra.mxu0 %v503
    %632 = vmatprep.subr.bf16.mxu0 0
    %633 = vmatpush1.bf16.msra.mxu0 %v502
    %634 = vmatprep.subr.bf16.mxu0 0
    %635 = vmatpush1.bf16.msra.mxu0 %v501
    %636 = vmatprep.subr.bf16.mxu0 0
    %637 = vmatpush1.bf16.msra.mxu0 %v500
    %638 = vmatprep.subr.bf16.mxu0 0
    %639 = vmatpush1.bf16.msra.mxu0 %v499
    %640 = vmatprep.subr.bf16.mxu0 0
    %641 = vmatpush1.bf16.msra.mxu0 %v498
    %642 = vmatprep.subr.bf16.mxu0 0
    %643 = vmatpush2.bf16.msra.mxu0 %v513
    %644 = vmatprep.subr.bf16.mxu0 0
    %645 = vmatpush2.bf16.msra.mxu0 %v512
    %646 = vmatprep.subr.bf16.mxu0 0
    %647 = vmatpush2.bf16.msra.mxu0 %v511
    %648 = vmatprep.subr.bf16.mxu0 0
    %649 = vmatpush2.bf16.msra.mxu0 %v510
    %650 = vmatprep.subr.bf16.mxu0 0
    %651 = vmatpush2.bf16.msra.mxu0 %v509
    %652 = vmatprep.subr.bf16.mxu0 0
    %653 = vmatpush2.bf16.msra.mxu0 %v508
    %654 = vmatprep.subr.bf16.mxu0 0
    %655 = vmatpush2.bf16.msra.mxu0 %v507
    %656 = vmatprep.subr.bf16.mxu0 0
    %657 = vmatpush2.bf16.msra.mxu0 %v506
    %658 = vmatprep.mubr.bf16.mxu0 %v227
    %659 = vmatmul.mubr.bf16.gmra.mxu0 %v226
    %v660 = vpop.f32.mrf.mxu0
    %v661 = vadd.f32 0.0, %v660
    %v662 = vpop.f32.mrf.mxu0
    %v663 = vpop.f32.mrf.mxu0
    %v664 = vadd.f32 0.0, %v663
    %v665 = vpop.f32.mrf.mxu0
    %666 = vdwg.mxu0
    %667 = vmatprep.subr.bf16.mxu0 0
    %668 = vmatpush1.bf16.msra.mxu0 %v521
    %669 = vmatprep.subr.bf16.mxu0 0
    %670 = vmatpush1.bf16.msra.mxu0 %v520
    %671 = vmatprep.subr.bf16.mxu0 0
    %672 = vmatpush1.bf16.msra.mxu0 %v519
    %673 = vmatprep.subr.bf16.mxu0 0
    %674 = vmatpush1.bf16.msra.mxu0 %v518
    %675 = vmatprep.subr.bf16.mxu0 0
    %676 = vmatpush1.bf16.msra.mxu0 %v517
    %677 = vmatprep.subr.bf16.mxu0 0
    %678 = vmatpush1.bf16.msra.mxu0 %v516
    %679 = vmatprep.subr.bf16.mxu0 0
    %680 = vmatpush1.bf16.msra.mxu0 %v515
    %681 = vmatprep.subr.bf16.mxu0 0
    %682 = vmatpush1.bf16.msra.mxu0 %v514
    %683 = vmatprep.subr.bf16.mxu0 0
    %684 = vmatpush2.bf16.msra.mxu0 %v529
    %685 = vmatprep.subr.bf16.mxu0 0
    %686 = vmatpush2.bf16.msra.mxu0 %v528
    %687 = vmatprep.subr.bf16.mxu0 0
    %688 = vmatpush2.bf16.msra.mxu0 %v527
    %689 = vmatprep.subr.bf16.mxu0 0
    %690 = vmatpush2.bf16.msra.mxu0 %v526
    %691 = vmatprep.subr.bf16.mxu0 0
    %692 = vmatpush2.bf16.msra.mxu0 %v525
    %693 = vmatprep.subr.bf16.mxu0 0
    %694 = vmatpush2.bf16.msra.mxu0 %v524
    %695 = vmatprep.subr.bf16.mxu0 0
    %696 = vmatpush2.bf16.msra.mxu0 %v523
    %697 = vmatprep.subr.bf16.mxu0 0
    %698 = vmatpush2.bf16.msra.mxu0 %v522
    %699 = vmatprep.mubr.bf16.mxu0 %v229
    %700 = vmatmul.mubr.bf16.gmra.mxu0 %v228
    %v701 = vpop.f32.mrf.mxu0
    %v702 = vadd.f32 %v661, %v701
    %v703 = vpop.f32.mrf.mxu0
    %v704 = vpop.f32.mrf.mxu0
    %v705 = vadd.f32 %v664, %v704
    %v706 = vpop.f32.mrf.mxu0
    %707 = vdwg.mxu0
    %708 = vmatprep.subr.bf16.mxu0 0
    %709 = vmatpush1.bf16.msra.mxu0 %v537
    %710 = vmatprep.subr.bf16.mxu0 0
    %711 = vmatpush1.bf16.msra.mxu0 %v536
    %712 = vmatprep.subr.bf16.mxu0 0
    %713 = vmatpush1.bf16.msra.mxu0 %v535
    %714 = vmatprep.subr.bf16.mxu0 0
    %715 = vmatpush1.bf16.msra.mxu0 %v534
    %716 = vmatprep.subr.bf16.mxu0 0
    %717 = vmatpush1.bf16.msra.mxu0 %v533
    %718 = vmatprep.subr.bf16.mxu0 0
    %719 = vmatpush1.bf16.msra.mxu0 %v532
    %720 = vmatprep.subr.bf16.mxu0 0
    %721 = vmatpush1.bf16.msra.mxu0 %v531
    %722 = vmatprep.subr.bf16.mxu0 0
    %723 = vmatpush1.bf16.msra.mxu0 %v530
    %724 = vmatprep.subr.bf16.mxu0 0
    %725 = vmatpush2.bf16.msra.mxu0 %v545
    %726 = vmatprep.subr.bf16.mxu0 0
    %727 = vmatpush2.bf16.msra.mxu0 %v544
    %728 = vmatprep.subr.bf16.mxu0 0
    %729 = vmatpush2.bf16.msra.mxu0 %v543
    %730 = vmatprep.subr.bf16.mxu0 0
    %731 = vmatpush2.bf16.msra.mxu0 %v542
    %732 = vmatprep.subr.bf16.mxu0 0
    %733 = vmatpush2.bf16.msra.mxu0 %v541
    %734 = vmatprep.subr.bf16.mxu0 0
    %735 = vmatpush2.bf16.msra.mxu0 %v540
    %736 = vmatprep.subr.bf16.mxu0 0
    %737 = vmatpush2.bf16.msra.mxu0 %v539
    %738 = vmatprep.subr.bf16.mxu0 0
    %739 = vmatpush2.bf16.msra.mxu0 %v538
    %740 = vmatprep.mubr.bf16.mxu0 %v231
    %741 = vmatmul.mubr.bf16.gmra.mxu0 %v230
    %v742 = vpop.f32.mrf.mxu0
    %v743 = vadd.f32 %v702, %v742
    %v744 = vpop.f32.mrf.mxu0
    %v745 = vpop.f32.mrf.mxu0
    %v746 = vadd.f32 %v705, %v745
    %v747 = vpop.f32.mrf.mxu0
    %748 = vdwg.mxu0
    %749 = vmatprep.subr.bf16.mxu0 0
    %750 = vmatpush1.bf16.msra.mxu0 %v553
    %751 = vmatprep.subr.bf16.mxu0 0
    %752 = vmatpush1.bf16.msra.mxu0 %v552
    %753 = vmatprep.subr.bf16.mxu0 0
    %754 = vmatpush1.bf16.msra.mxu0 %v551
    %755 = vmatprep.subr.bf16.mxu0 0
    %756 = vmatpush1.bf16.msra.mxu0 %v550
    %757 = vmatprep.subr.bf16.mxu0 0
    %758 = vmatpush1.bf16.msra.mxu0 %v549
    %759 = vmatprep.subr.bf16.mxu0 0
    %760 = vmatpush1.bf16.msra.mxu0 %v548
    %761 = vmatprep.subr.bf16.mxu0 0
    %762 = vmatpush1.bf16.msra.mxu0 %v547
    %763 = vmatprep.subr.bf16.mxu0 0
    %764 = vmatpush1.bf16.msra.mxu0 %v546
    %765 = vmatprep.subr.bf16.mxu0 0
    %766 = vmatpush2.bf16.msra.mxu0 %v561
    %767 = vmatprep.subr.bf16.mxu0 0
    %768 = vmatpush2.bf16.msra.mxu0 %v560
    %769 = vmatprep.subr.bf16.mxu0 0
    %770 = vmatpush2.bf16.msra.mxu0 %v559
    %771 = vmatprep.subr.bf16.mxu0 0
    %772 = vmatpush2.bf16.msra.mxu0 %v558
    %773 = vmatprep.subr.bf16.mxu0 0
    %774 = vmatpush2.bf16.msra.mxu0 %v557
    %775 = vmatprep.subr.bf16.mxu0 0
    %776 = vmatpush2.bf16.msra.mxu0 %v556
    %777 = vmatprep.subr.bf16.mxu0 0
    %778 = vmatpush2.bf16.msra.mxu0 %v555
    %779 = vmatprep.subr.bf16.mxu0 0
    %780 = vmatpush2.bf16.msra.mxu0 %v554
    %781 = vmatprep.mubr.bf16.mxu0 %v233
    %782 = vmatmul.mubr.bf16.gmra.mxu0 %v232
    %v783 = vpop.f32.mrf.mxu0
    %v784 = vadd.f32 %v743, %v783
    %v785 = vpop.f32.mrf.mxu0
    %v786 = vpop.f32.mrf.mxu0
    %v787 = vadd.f32 %v746, %v786
    %v788 = vpop.f32.mrf.mxu0
    %789 = vdwg.mxu0
    %p790 = scmp.eq.s32.totalorder 0, 0
    // Predicated region
    $region34: #{tpu_custom_call.1} parent=1 // pred_check
      %p791 = pneg %p790
    $region35: #{tpu_custom_call.1} parent=1 // pred_check_branch
      %793 = sbr.rel (%p791) target = $region37
    $region36: #{tpu_custom_call.1} parent=1 // pred_region
      %794 = vst [vmem:[#allocation9] sm:$0xff] %v784
      %795 = vst [vmem:[#allocation9 + $0x8] sm:$0xff] %v787
    $region37: #{tpu_custom_call.1} parent=1 // pred_fallthru
      _
    %p796 = scmp.gt.s32.totalorder 0, 0
    // Predicated region
    $region38: #{tpu_custom_call.1} parent=1 // pred_check
      %p797 = pneg %p796
    $region39: #{tpu_custom_call.1} parent=1 // pred_check_branch
      %799 = sbr.rel (%p797) target = $region41
    $region40: #{tpu_custom_call.1} parent=1 // pred_region
      %v800 = vld [vmem:[#allocation9] sm:$0xff]
      %v801 = vld [vmem:[#allocation9 + $0x8] sm:$0xff]
      %v802 = vadd.f32 %v800, %v784
      %v803 = vadd.f32 %v801, %v787
      %804 = vst [vmem:[#allocation9] sm:$0xff] %v802
      %805 = vst [vmem:[#allocation9 + $0x8] sm:$0xff] %v803
    $region41: #{tpu_custom_call.1} parent=1 // pred_fallthru
      _
    // Predicated region
    $region42: #{tpu_custom_call.1} parent=1 // pred_check
      %p806 = pneg %p790
    $region43: #{tpu_custom_call.1} parent=1 // pred_check_branch
      %808 = sbr.rel (%p806) target = $region45
    $region44: #{tpu_custom_call.1} parent=1 // pred_region
      %v809 = vld [vmem:[#allocation9] sm:$0xff]
      %v810 = vld [vmem:[#allocation9 + $0x8] sm:$0xff]
      %v811 = vld [vmem:[%s2] sm:$0x1]
      %v813 = vlaneseq
      %v814 = vshrl.u32 %v813, 7
      %v815 = vsub.s32 0, %v814
      %v816 = vrot.slane %v811, %v815
      %v818 = vadd.f32 %v809, %v816
      %v819 = vadd.f32 %v810, %v816
      %v820 = vmul.f32 %v818, %v818
      %v821 = vmul.f32 %v819, %v819
      %822 = vadd.xlane.f32.xlu0 %v820
      %v823 = vpop.xlane.xlu0 %822
      %824 = vadd.xlane.f32.xlu0 %v821
      %v825 = vpop.xlane.xlu0 %824
      %v826 = vrsqrt.pop %v823
      %v827 = vrsqrt.pop %v825
      %v828 = vmul.f32 %v818, %v826
      %v829 = vmul.f32 %v819, %v827
      %830 = vst [vmem:[#allocation9] sm:$0xff] %v828
      %831 = vst [vmem:[#allocation9 + $0x8] sm:$0xff] %v829
      %v832 = vpack.c.bf16 %v829, %v828
      %v833 = vld [vmem:[#allocation7] sm:$0xf]
      %v834 = vld [vmem:[#allocation7 + $0x4] sm:$0xf]
      %v835 = vld [vmem:[#allocation7 + $0x8] sm:$0xf]
      %v836 = vld [vmem:[#allocation7 + $0xc] sm:$0xf]
      %v837 = vld [vmem:[#allocation7 + $0x10] sm:$0xf]
      %v838 = vld [vmem:[#allocation7 + $0x14] sm:$0xf]
      %v839 = vld [vmem:[#allocation7 + $0x18] sm:$0xf]
      %v840 = vld [vmem:[#allocation7 + $0x1c] sm:$0xf]
      %v841 = vld [vmem:[#allocation7 + $0x20] sm:$0xf]
      %v842 = vld [vmem:[#allocation7 + $0x24] sm:$0xf]
      %v843 = vld [vmem:[#allocation7 + $0x28] sm:$0xf]
      %v844 = vld [vmem:[#allocation7 + $0x2c] sm:$0xf]
      %v845 = vld [vmem:[#allocation7 + $0x30] sm:$0xf]
      %v846 = vld [vmem:[#allocation7 + $0x34] sm:$0xf]
      %v847 = vld [vmem:[#allocation7 + $0x38] sm:$0xf]
      %v848 = vld [vmem:[#allocation7 + $0x3c] sm:$0xf]
      %v849 = vld [vmem:[%s4] sm:$0x1]
      %v851 = vlaneseq
      %v852 = vshrl.u32 %v851, 7
      %v853 = vsub.s32 0, %v852
      %v854 = vrot.slane %v849, %v853
      %v872 = vunpack.c.l.b16 %v833
      %v873 = vunpack.c.l.b16 %v834
      %v874 = vunpack.c.l.b16 %v835
      %v875 = vunpack.c.l.b16 %v836
      %v876 = vunpack.c.l.b16 %v837
      %v877 = vunpack.c.l.b16 %v838
      %v878 = vunpack.c.l.b16 %v839
      %v879 = vunpack.c.l.b16 %v840
      %v880 = vunpack.c.l.b16 %v841
      %v881 = vunpack.c.l.b16 %v842
      %v882 = vunpack.c.l.b16 %v843
      %v883 = vunpack.c.l.b16 %v844
      %v884 = vunpack.c.l.b16 %v845
      %v885 = vunpack.c.l.b16 %v846
      %v886 = vunpack.c.l.b16 %v847
      %v887 = vunpack.c.l.b16 %v848
      %v888 = vpack.c.b16 %v873, %v872
      %v889 = vpack.c.b16 %v875, %v874
      %v890 = vpack.c.b16 %v877, %v876
      %v891 = vpack.c.b16 %v879, %v878
      %v892 = vpack.c.b16 %v881, %v880
      %v893 = vpack.c.b16 %v883, %v882
      %v894 = vpack.c.b16 %v885, %v884
      %v895 = vpack.c.b16 %v887, %v886
      %904 = vmatprep.subr.bf16.mxu0 0
      %905 = vmatpush1.bf16.msra.mxu0 %v895
      %906 = vmatprep.subr.bf16.mxu0 0
      %907 = vmatpush1.bf16.msra.mxu0 %v894
      %908 = vmatprep.subr.bf16.mxu0 0
      %909 = vmatpush1.bf16.msra.mxu0 %v893
      %910 = vmatprep.subr.bf16.mxu0 0
      %911 = vmatpush1.bf16.msra.mxu0 %v892
      %912 = vmatprep.subr.bf16.mxu0 0
      %913 = vmatpush1.bf16.msra.mxu0 %v891
      %914 = vmatprep.subr.bf16.mxu0 0
      %915 = vmatpush1.bf16.msra.mxu0 %v890
      %916 = vmatprep.subr.bf16.mxu0 0
      %917 = vmatpush1.bf16.msra.mxu0 %v889
      %918 = vmatprep.subr.bf16.mxu0 0
      %919 = vmatpush1.bf16.msra.mxu0 %v888
      %920 = vmatprep.subr.bf16.mxu0 0
      %921 = vmatpush2.bf16.msra.mxu0 0
      %922 = vmatprep.subr.bf16.mxu0 0
      %923 = vmatpush2.bf16.msra.mxu0 0
      %924 = vmatprep.subr.bf16.mxu0 0
      %925 = vmatpush2.bf16.msra.mxu0 0
      %926 = vmatprep.subr.bf16.mxu0 0
      %927 = vmatpush2.bf16.msra.mxu0 0
      %928 = vmatprep.subr.bf16.mxu0 0
      %929 = vmatpush2.bf16.msra.mxu0 0
      %930 = vmatprep.subr.bf16.mxu0 0
      %931 = vmatpush2.bf16.msra.mxu0 0
      %932 = vmatprep.subr.bf16.mxu0 0
      %933 = vmatpush2.bf16.msra.mxu0 0
      %934 = vmatprep.subr.bf16.mxu0 0
      %935 = vmatpush2.bf16.msra.mxu0 0
      %936 = vmatprep.mubr.bf16.mxu0 0
      %937 = vmatmul.mubr.bf16.gmra.mxu0 %v832
      %v938 = vpop.f32.mrf.mxu0
      %v939 = vadd.f32 %v854, %v938
      %v940 = vpop.f32.mrf.mxu0
      %v941 = vpop.f32.mrf.mxu0
      %v942 = vadd.f32 %v854, %v941
      %v943 = vpop.f32.mrf.mxu0
      %944 = vdwg.mxu0
      %945 = vst [vmem:[#allocation8] sm:$0xff] %v939
      %946 = vst [vmem:[#allocation8 + $0x8] sm:$0xff] %v942
    $region45: #{tpu_custom_call.1} parent=1 // pred_fallthru
      _
    // Predicated region
    $region46: #{tpu_custom_call.1} parent=1 // pred_check
      _
    $region47: #{tpu_custom_call.1} parent=1 // pred_check_branch
      %948 = sbr.rel (0) target = $region49
    $region48: #{tpu_custom_call.1} parent=1 // pred_region
      %s950 = ssub.s32 256, 256
      %951 = vsyncadd [#allocation4], %s950
      %s952 = sshll.u32 [#allocation8], 4
      %s953 = int_to_ptr.vmem [resolvable:$true] %s952
      %958 = dma.vmem_to_hbm [thread:$0]  %s953, 256, %s5, [#allocation4], 128, 128, 8
    $region49: #{tpu_custom_call.1} parent=1 // pred_fallthru
      _
    // Predicated region
    $region50: #{tpu_custom_call.1} parent=1 // pred_check
      _
    $region51: #{tpu_custom_call.1} parent=1 // pred_check_branch
      %960 = sbr.rel (0) target = $region53
    $region52: #{tpu_custom_call.1} parent=1 // pred_region
      %s962 = ssub.s32 256, 256
      %963 = vsyncadd [#allocation10], %s962
      %s964 = sshll.u32 [#allocation9], 4
      %s965 = int_to_ptr.vmem [resolvable:$true] %s964
      %970 = dma.vmem_to_hbm [thread:$0]  %s965, 256, %s6, [#allocation10], 128, 128, 8
    $region53: #{tpu_custom_call.1} parent=1 // pred_fallthru
      _
    // Predicated region
    $region54: #{tpu_custom_call.1} parent=1 // pred_check
      _
    $region55: #{tpu_custom_call.1} parent=1 // pred_check_branch
      %972 = sbr.rel (0) target = $region57
    $region56: #{tpu_custom_call.1} parent=1 // pred_region
      %973 = dma.done [#allocation4], 256
    $region57: #{tpu_custom_call.1} parent=1 // pred_fallthru
      _
    // Predicated region
    $region58: #{tpu_custom_call.1} parent=1 // pred_check
      _
    $region59: #{tpu_custom_call.1} parent=1 // pred_check_branch
      %975 = sbr.rel (0) target = $region61
    $region60: #{tpu_custom_call.1} parent=1 // pred_region
      %976 = dma.done [#allocation10], 256
    $region61: #{tpu_custom_call.1} parent=1 // pred_fallthru
      _
    %977 = vsyncpa [#allocation3], 1
    %978 = vsyncpa [#allocation6], 1
    %979 = vsyncpa [#allocation4], 1
    %980 = vsyncpa [#allocation10], 1

</llo_original>
